<compile_context>
chip_gen: v6e
topology: v6e:2x2x1
jax: 0.10.0
libtpu: 0.0.40
codegen_flags: <defaults>
</compile_context>

<pallas_src>
import functools

import numpy as np
import jax
import jax.numpy as jnp
from jax import lax
from jax.experimental import pallas as pl
from jax.experimental.pallas import tpu as pltpu


_DEFAULT_BLOCK_BYTES = 512 * 1024        # target bytes per pred/target block


def _cdiv(a, b):
    return -(-a // b)


# --------------------------------------------------------------------------- #
# Tiling plan                                                                  #
# --------------------------------------------------------------------------- #
def _pick_bb(B, per_batch_bytes, block_bytes):
    """Fold whole batch elements into one block when they are tiny, keeping at
    least two batch blocks so the leading 'parallel' grid axis can still be
    split across the two v7x TensorCores."""
    if B <= 1:
        return 1
    bb = 1
    for d in range(2, B + 1):
        if B % d:
            continue
        if B // d < 2:
            continue
        if d * per_batch_bytes > block_bytes:
            continue
        bb = d
    return bb


def _largest_mult8_divisor(n, cap):
    """Largest d with d % 8 == 0, d | n, d <= cap (requires n % 8 == 0)."""
    best = 8
    k = n // 8
    for f in range(1, k + 1):
        if k % f == 0 and 8 * f <= cap:
            best = 8 * f
    return best


def _plan_tiles(B, R, W, Rm, itemsize, block_bytes):
    """Pick block dims (bb, tr, tw) and grid extents.

    Data is viewed as (B, R, W); the mask as (B, Rm, W) with R = rep * Rm.
    Grid = (B//bb, nW, nR, rep) with the channel-group axis `rep` innermost so
    the mask block stays resident across it.
    """
    rep = R // Rm
    bb = _pick_bb(B, R * W * itemsize, block_bytes)

    if rep > 1:
        min_tr = 8                       # Rm % 8 == 0 guaranteed on this path
    else:
        min_tr = 8 if R >= 8 else R

    # lane tile: keep the full last dim whenever it fits (lane-dense, no
    # ragged lanes); only very long flat rows get tiled along lanes.
    if W <= 128 or bb * min_tr * W * itemsize <= block_bytes:
        tw, nW, ragged_w = W, 1, False
    else:
        tw = max(128, (block_bytes // (bb * min_tr * itemsize)) // 128 * 128)
        if tw >= W:
            tw, nW, ragged_w = W, 1, False
        else:
            nW = _cdiv(W, tw)
            ragged_w = (W % tw) != 0

    # row tile
    row_budget = max(1, block_bytes // (bb * tw * itemsize))
    if rep > 1:
        tr = _largest_mult8_divisor(Rm, max(8, row_budget))
        nR, ragged_r = Rm // tr, False
    else:
        if R <= max(row_budget, 8):
            tr, nR, ragged_r = R, 1, False
        else:
            tr = max(8, (row_budget // 8) * 8)
            nR = _cdiv(R, tr)
            ragged_r = (R % tr) != 0
    return bb, tr, tw, nR, nW, rep, ragged_r, ragged_w


# --------------------------------------------------------------------------- #
# Kernels                                                                      #
# --------------------------------------------------------------------------- #
def _make_masked_kernel(tr, tw, R, W, ragged_r, ragged_w):
    def kernel(x_ref, y_ref, m_ref, sum_ref, cnt_ref, acc_s, acc_c):
        w_i = pl.program_id(1)
        r_i = pl.program_id(2)
        c_i = pl.program_id(3)
        first = jnp.logical_and(jnp.logical_and(w_i == 0, r_i == 0), c_i == 0)
        last = jnp.logical_and(
            jnp.logical_and(w_i == pl.num_programs(1) - 1,
                            r_i == pl.num_programs(2) - 1),
            c_i == pl.num_programs(3) - 1)

        @pl.when(first)
        def _():
            acc_s[...] = jnp.zeros_like(acc_s)
            acc_c[...] = jnp.zeros_like(acc_c)

        x = x_ref[...].astype(jnp.float32)          # (bb, tr, tw) native -> f32
        y = y_ref[...].astype(jnp.float32)
        valid = m_ref[...] != 0                     # int8 -> bool
        if ragged_r:   # row tail (only possible when rep == 1)
            rows = r_i * tr + lax.broadcasted_iota(jnp.int32, (1, tr, tw), 1)
            valid = jnp.logical_and(valid, rows < R)
        if ragged_w:   # lane tail
            cols = w_i * tw + lax.broadcasted_iota(jnp.int32, (1, tr, tw), 2)
            valid = jnp.logical_and(valid, cols < W)

        # where (not multiply) so masked-out non-finite values never poison the
        # sum; per-step sublane reduce keeps the resident accumulators tiny.
        diff = jnp.where(valid, jnp.abs(x - y), 0.0)
        acc_s[...] += jnp.sum(diff, axis=1, keepdims=True)
        acc_c[...] += jnp.sum(valid.astype(jnp.int32), axis=1, keepdims=True)

        @pl.when(last)
        def _():
            s = jnp.sum(acc_s[...], axis=2, keepdims=True)       # (bb, 1, 1)
            c = jnp.sum(acc_c[...], axis=2, keepdims=True)
            sum_ref[...] = jnp.broadcast_to(s, sum_ref.shape)    # lane-dense
            cnt_ref[...] = jnp.broadcast_to(c, cnt_ref.shape)
    return kernel


def _make_unmasked_kernel(tr, tw, R, W, ragged_r, ragged_w):
    def kernel(x_ref, y_ref, sum_ref, acc_s):
        w_i = pl.program_id(1)
        r_i = pl.program_id(2)
        first = jnp.logical_and(w_i == 0, r_i == 0)
        last = jnp.logical_and(w_i == pl.num_programs(1) - 1,
                               r_i == pl.num_programs(2) - 1)

        @pl.when(first)
        def _():
            acc_s[...] = jnp.zeros_like(acc_s)

        x = x_ref[...].astype(jnp.float32)
        y = y_ref[...].astype(jnp.float32)
        diff = jnp.abs(x - y)
        if ragged_r or ragged_w:
            valid = None
            if ragged_r:
                rows = r_i * tr + lax.broadcasted_iota(jnp.int32, (1, tr, tw), 1)
                valid = rows < R
            if ragged_w:
                cols = w_i * tw + lax.broadcasted_iota(jnp.int32, (1, tr, tw), 2)
                inb = cols < W
                valid = inb if valid is None else jnp.logical_and(valid, inb)
            diff = jnp.where(valid, diff, 0.0)
        acc_s[...] += jnp.sum(diff, axis=1, keepdims=True)

        @pl.when(last)
        def _():
            s = jnp.sum(acc_s[...], axis=2, keepdims=True)
            sum_ref[...] = jnp.broadcast_to(s, sum_ref.shape)
    return kernel


# --------------------------------------------------------------------------- #
# pallas_call runners                                                          #
# --------------------------------------------------------------------------- #
def _run_masked(x3, y3, m3, B, R, W, Rm, block_bytes):
    isz = max(x3.dtype.itemsize, y3.dtype.itemsize)
    bb, tr, tw, nR, nW, rep, ragged_r, ragged_w = _plan_tiles(
        B, R, W, Rm, isz, block_bytes)

    data_spec = pl.BlockSpec((bb, tr, tw), lambda b, w, r, c: (b, c * nR + r, w))
    # mask block index ignores the channel-group axis c: the resident block is
    # re-used for `rep` consecutive steps, so the unexpanded mask is DMA'd only
    # once per (batch block, row tile).
    mask_spec = pl.BlockSpec((bb, tr, tw), lambda b, w, r, c: (b, r, w))
    out_spec = pl.BlockSpec((bb, 1, 128), lambda b, w, r, c: (b, 0, 0))

    sums, cnts = pl.pallas_call(
        _make_masked_kernel(tr, tw, R, W, ragged_r, ragged_w),
        out_shape=(jax.ShapeDtypeStruct((B, 1, 128), jnp.float32),
                   jax.ShapeDtypeStruct((B, 1, 128), jnp.int32)),
        grid_spec=pltpu.PrefetchScalarGridSpec(
            num_scalar_prefetch=0,
            grid=(B // bb, nW, nR, rep),
            in_specs=[data_spec, data_spec, mask_spec],
            out_specs=[out_spec, out_spec],
            scratch_shapes=[pltpu.VMEM((bb, 1, tw), jnp.float32),
                            pltpu.VMEM((bb, 1, tw), jnp.int32)]),
        compiler_params=pltpu.CompilerParams(
            dimension_semantics=("parallel", "arbitrary", "arbitrary",
                                 "arbitrary")),
    )(x3, y3, m3)
    return sums[:, 0, 0], cnts[:, 0, 0]


def _run_unmasked(x3, y3, B, R, W, block_bytes):
    isz = max(x3.dtype.itemsize, y3.dtype.itemsize)
    bb, tr, tw, nR, nW, _, ragged_r, ragged_w = _plan_tiles(
        B, R, W, R, isz, block_bytes)

    data_spec = pl.BlockSpec((bb, tr, tw), lambda b, w, r: (b, r, w))
    out_spec = pl.BlockSpec((bb, 1, 128), lambda b, w, r: (b, 0, 0))

    sums = pl.pallas_call(
        _make_unmasked_kernel(tr, tw, R, W, ragged_r, ragged_w),
        out_shape=jax.ShapeDtypeStruct((B, 1, 128), jnp.float32),
        grid_spec=pltpu.PrefetchScalarGridSpec(
            num_scalar_prefetch=0,
            grid=(B // bb, nW, nR),
            in_specs=[data_spec, data_spec],
            out_specs=out_spec,
            scratch_shapes=[pltpu.VMEM((bb, 1, tw), jnp.float32)]),
        compiler_params=pltpu.CompilerParams(
            dimension_semantics=("parallel", "arbitrary", "arbitrary")),
    )(x3, y3)
    return sums[:, 0, 0]


# --------------------------------------------------------------------------- #
# Shape plumbing                                                               #
# --------------------------------------------------------------------------- #
def _normalize_data(a):
    """(B, d1..dk, W) -> (B, R, W): merge middle dims, keep the last dim as the
    lane dim so the HBM layout of the operand is (usually) untouched."""
    B = a.shape[0]
    if a.ndim <= 1:
        return a.reshape(B, 1, 1), 1, 1
    W = a.shape[-1]
    R = int(np.prod(a.shape[1:-1])) if a.ndim > 2 else 1
    return a.reshape(B, R, W), R, W


def _analyze_mask(mask_shape, tgt_shape):
    """If the mask broadcast pattern is 'repeat over leading middle dims'
    (e.g. (B,1,H,W) against (B,C,H,W)), return the mask row count Rm after
    (B, Rm, W) normalisation; otherwise return None (caller materialises)."""
    if len(mask_shape) != len(tgt_shape):
        return None
    if tuple(mask_shape) == tuple(tgt_shape):
        return int(np.prod(tgt_shape[1:-1])) if len(tgt_shape) > 2 else 1
    if mask_shape[0] != tgt_shape[0] or mask_shape[-1] != tgt_shape[-1]:
        return None
    mids_m, mids_t = tuple(mask_shape[1:-1]), tuple(tgt_shape[1:-1])
    j = len(mids_t)
    while j > 0 and mids_m[j - 1] == mids_t[j - 1]:
        j -= 1
    if any(d != 1 for d in mids_m[:j]):
        return None
    Rm = int(np.prod(mids_t[j:])) if j < len(mids_t) else 1
    R = int(np.prod(mids_t)) if mids_t else 1
    if Rm == 0 or R % Rm:
        return None
    if R // Rm > 1 and (Rm < 8 or Rm % 8):
        return None          # can't tile the mask rows cleanly -> materialise
    return Rm


def _masked_l1(pred, target, mask, block_bytes):
    B = target.shape[0]
    numel = int(np.prod(target.shape[1:])) if target.ndim > 1 else (1 if B else 0)
    if B == 0 or numel == 0:
        return jnp.float32(0.0)

    x3, R, W = _normalize_data(pred)
    y3, _, _ = _normalize_data(target)

    Rm = _analyze_mask(tuple(mask.shape), tuple(target.shape))
    if Rm is None:
        # TODO(synk): broadcast patterns other than 'expand over leading
        # channel-like dims' have no cheap index_map expression; fall back to
        # materialising the expanded mask (still int8, 1 byte / element).
        m_b = jnp.broadcast_to(mask, target.shape)
        Rm = R
    else:
        m_b = mask
    if m_b.dtype != jnp.int8:
        if m_b.dtype != jnp.bool_:
            m_b = m_b != 0
        m_b = m_b.astype(jnp.int8)
    m3 = m_b.reshape(B, Rm, W)

    s, c = _run_masked(x3, y3, m3, B, R, W, Rm, block_bytes)
    per = jnp.where(c > 0, s / jnp.maximum(c.astype(jnp.float32), 1.0), 0.0)
    return jnp.sum(per) / np.float32(B)


def _unmasked_l1(pred, target, block_bytes):
    B = target.shape[0]
    numel = int(np.prod(target.shape[1:])) if target.ndim > 1 else (1 if B else 0)
    if B == 0 or numel == 0:
        return jnp.float32(0.0)
    x3, R, W = _normalize_data(pred)
    y3, _, _ = _normalize_data(target)
    s = _run_unmasked(x3, y3, B, R, W, block_bytes)
    # every element is valid -> the per-batch count is the static numel
    return jnp.sum(s) / np.float32(B * numel)


@functools.partial(jax.jit, static_argnames=("block_bytes",))
def _masked_l1_jit(pred, target, mask, block_bytes=_DEFAULT_BLOCK_BYTES):
    return _masked_l1(pred, target, mask, block_bytes)


@functools.partial(jax.jit, static_argnames=("block_bytes",))
def _unmasked_l1_jit(pred, target, block_bytes=_DEFAULT_BLOCK_BYTES):
    return _unmasked_l1(pred, target, block_bytes)


def l1_forward(_output, _input, branch='rgb_rays', target='rgb_rays',
               valid='src_valid', block_bytes=_DEFAULT_BLOCK_BYTES):
    """Mimics L1.forward(_output, _input)."""
    if branch not in _output or target not in _input:
        return jnp.float32(0.0)
    pred = _output[branch]
    tgt = _input[target]
    if valid in _input:
        return _masked_l1_jit(pred, tgt, _input[valid], block_bytes=block_bytes)
    # No mask: skip streaming an all-ones array; use the static element count.
    return _unmasked_l1_jit(pred, tgt, block_bytes=block_bytes)


# --------------------------------------------------------------------------- #
# Pure-JAX reference (for correctness checks)                                  #
# --------------------------------------------------------------------------- #
def _reference_loss(pred, target, mask=None):
    B = target.shape[0]
    p = pred.astype(jnp.float32).reshape(B, -1)
    t = target.astype(jnp.float32).reshape(B, -1)
    if mask is None:
        m = jnp.ones_like(t)
    else:
        m = jnp.broadcast_to(mask, target.shape).reshape(B, -1).astype(jnp.float32)
    diff = jnp.where(m > 0, jnp.abs(p - t), 0.0)
    s = diff.sum(-1)
    c = m.sum(-1)
    per = jnp.where(c > 0, s / jnp.maximum(c, 1.0), 0.0)
    return per.sum() / B


# --------------------------------------------------------------------------- #
if __name__ == "__main__":
    key = jax.random.PRNGKey(0)
    ks = jax.random.split(key, 12)
    ref_fn = jax.jit(_reference_loss)

    # 1) image-style: (B,C,H,W) data, (B,1,H,W) mask broadcast over channels,
    #    one batch element fully masked out.
    B, C, H, W = 2, 4, 16, 16
    pred = jax.random.uniform(ks[0], (B, C, H, W), jnp.float32)
    tgt = jax.random.uniform(ks[1], (B, C, H, W), jnp.float32)
    mask = jax.random.uniform(ks[2], (B, 1, H, W)) > 0.3
    mask = mask.at[1].set(False)
    out = jax.block_until_ready(
        l1_forward({'rgb_rays': pred}, {'rgb_rays': tgt, 'src_valid': mask}))
    ref = jax.block_until_ready(ref_fn(pred, tgt, mask))
    assert jnp.isfinite(out), out
    assert jnp.allclose(out, ref, rtol=1e-5, atol=1e-6), (float(out), float(ref))

    # 2) no-mask path (static count; no ones array is ever built)
    out2 = jax.block_until_ready(l1_forward({'rgb_rays': pred}, {'rgb_rays': tgt}))
    ref2 = jax.block_until_ready(ref_fn(pred, tgt))
    assert jnp.allclose(out2, ref2, rtol=1e-5, atol=1e-6), (float(out2), float(ref2))

    # 3) missing-key path returns 0 (matches the torch module)
    assert float(l1_forward({'other': pred}, {'rgb_rays': tgt})) == 0.0

    # 4) bf16 inputs + channel-broadcast mask + multi-step channel-group axis
    p4 = jax.random.normal(ks[3], (2, 3, 40, 128), jnp.float32).astype(jnp.bfloat16)
    t4 = jax.random.normal(ks[4], (2, 3, 40, 128), jnp.float32).astype(jnp.bfloat16)
    m4 = jax.random.uniform(ks[5], (2, 1, 40, 128)) > 0.5
    out4 = jax.block_until_ready(_masked_l1_jit(p4, t4, m4, block_bytes=16 * 1024))
    ref4 = jax.block_until_ready(ref_fn(p4, t4, m4))
    assert jnp.allclose(out4, ref4, rtol=1e-4, atol=1e-5), (float(out4), float(ref4))

    # 5) full-shape mask + ragged row tiles (R % tr != 0, in-kernel tail mask)
    p5 = jax.random.uniform(ks[6], (2, 100, 128), jnp.float32)
    t5 = jax.random.uniform(ks[7], (2, 100, 128), jnp.float32)
    m5 = jax.random.uniform(ks[8], (2, 100, 128)) > 0.4
    out5 = jax.block_until_ready(_masked_l1_jit(p5, t5, m5, block_bytes=16 * 1024))
    ref5 = jax.block_until_ready(ref_fn(p5, t5, m5))
    assert jnp.allclose(out5, ref5, rtol=1e-5, atol=1e-6), (float(out5), float(ref5))

    # 6) tiny per-batch payload: several batch elements folded into one block
    p6 = jax.random.uniform(ks[9], (8, 64), jnp.float32)
    t6 = jax.random.uniform(ks[10], (8, 64), jnp.float32)
    m6 = jax.random.uniform(ks[11], (8, 64)) > 0.5
    out6 = jax.block_until_ready(_masked_l1_jit(p6, t6, m6))
    ref6 = jax.block_until_ready(ref_fn(p6, t6, m6))
    assert jnp.allclose(out6, ref6, rtol=1e-5, atol=1e-6), (float(out6), float(ref6))

    # 7) long flat rows: lane tiling with a ragged last lane tile
    p7 = jax.random.uniform(ks[0], (2, 5000), jnp.float32)
    t7 = jax.random.uniform(ks[1], (2, 5000), jnp.float32)
    m7 = jax.random.uniform(ks[2], (2, 5000)) > 0.5
    out7 = jax.block_until_ready(_masked_l1_jit(p7, t7, m7, block_bytes=8 * 1024))
    ref7 = jax.block_until_ready(ref_fn(p7, t7, m7))
    assert jnp.allclose(out7, ref7, rtol=1e-5, atol=1e-6), (float(out7), float(ref7))

    print("KERNEL_OK")
</pallas_src>

<mosaic_0001>
module attributes {stable_mosaic.version = 11 : i64} {
  func.func @kernel(%arg0: i32, %arg1: i32, %arg2: i32, %arg3: i32, %arg4: memref<1x16x16xf32, #tpu.memory_space<vmem>>, %arg5: memref<1x16x16xf32, #tpu.memory_space<vmem>>, %arg6: memref<1x16x16xi8, #tpu.memory_space<vmem>>, %arg7: memref<1x1x128xf32, #tpu.memory_space<vmem>>, %arg8: memref<1x1x128xi32, #tpu.memory_space<vmem>>, %arg9: memref<1x1x16xf32, #tpu.memory_space<vmem>>, %arg10: memref<1x1x16xi32, #tpu.memory_space<vmem>>) attributes {dimension_semantics = [#tpu.dimension_semantics<parallel>, #tpu.dimension_semantics<arbitrary>, #tpu.dimension_semantics<arbitrary>, #tpu.dimension_semantics<arbitrary>], iteration_bounds = array<i64: 2, 1, 1, 4>, scalar_prefetch = 0 : i64, scratch_operands = 2 : i64, tpu.core_type = #tpu.core_type<tc>, window_params = [{transform_indices = @transform_0, window_bounds = array<i64: 1, 16, 16>}, {transform_indices = @transform_1, window_bounds = array<i64: 1, 16, 16>}, {transform_indices = @transform_2, window_bounds = array<i64: 1, 16, 16>}, {transform_indices = @transform_3, window_bounds = array<i64: 1, 1, 128>}, {transform_indices = @transform_4, window_bounds = array<i64: 1, 1, 128>}]} {
    %c0_i32 = arith.constant 0 : i32
    %0 = arith.cmpi eq, %arg1, %c0_i32 : i32
    %c0_i32_0 = arith.constant 0 : i32
    %1 = arith.cmpi eq, %arg2, %c0_i32_0 : i32
    %2 = arith.andi %0, %1 : i1
    %c0_i32_1 = arith.constant 0 : i32
    %3 = arith.cmpi eq, %arg3, %c0_i32_1 : i32
    %4 = arith.andi %2, %3 : i1
    %c0_i32_2 = arith.constant 0 : i32
    %5 = arith.cmpi eq, %arg1, %c0_i32_2 : i32
    %c0_i32_3 = arith.constant 0 : i32
    %6 = arith.cmpi eq, %arg2, %c0_i32_3 : i32
    %7 = arith.andi %5, %6 : i1
    %c3_i32 = arith.constant 3 : i32
    %8 = arith.cmpi eq, %arg3, %c3_i32 : i32
    %9 = arith.andi %7, %8 : i1
    %10 = arith.extui %4 : i1 to i32
    %c0_i32_4 = arith.constant 0 : i32
    %11 = arith.cmpi ne, %10, %c0_i32_4 : i32
    scf.if %11 {
      %cst_28 = arith.constant 0.000000e+00 : f32
      %34 = vector.broadcast %cst_28 : f32 to vector<1x1x16xf32>
      %c0_29 = arith.constant 0 : index
      %c0_30 = arith.constant 0 : index
      %c0_31 = arith.constant 0 : index
      %35 = vector.load %arg9[%c0_29, %c0_30, %c0_31] : memref<1x1x16xf32, #tpu.memory_space<vmem>>, vector<1x1x16xf32>
      tpu.vector_store %arg9[%c0_29, %c0_30, %c0_31], %34 {strides = array<i32>} : memref<1x1x16xf32, #tpu.memory_space<vmem>>, vector<1x1x16xf32>,
      %c0_i32_32 = arith.constant 0 : i32
      %36 = vector.broadcast %c0_i32_32 : i32 to vector<1x1x16xi32>
      %c0_33 = arith.constant 0 : index
      %c0_34 = arith.constant 0 : index
      %c0_35 = arith.constant 0 : index
      %37 = vector.load %arg10[%c0_33, %c0_34, %c0_35] : memref<1x1x16xi32, #tpu.memory_space<vmem>>, vector<1x1x16xi32>
      tpu.vector_store %arg10[%c0_33, %c0_34, %c0_35], %36 {strides = array<i32>} : memref<1x1x16xi32, #tpu.memory_space<vmem>>, vector<1x1x16xi32>,
    } else {
    }
    %c0 = arith.constant 0 : index
    %c0_5 = arith.constant 0 : index
    %c0_6 = arith.constant 0 : index
    %12 = vector.load %arg4[%c0, %c0_5, %c0_6] : memref<1x16x16xf32, #tpu.memory_space<vmem>>, vector<1x16x16xf32>
    %c0_7 = arith.constant 0 : index
    %c0_8 = arith.constant 0 : index
    %c0_9 = arith.constant 0 : index
    %13 = vector.load %arg5[%c0_7, %c0_8, %c0_9] : memref<1x16x16xf32, #tpu.memory_space<vmem>>, vector<1x16x16xf32>
    %c0_10 = arith.constant 0 : index
    %c0_11 = arith.constant 0 : index
    %c0_12 = arith.constant 0 : index
    %14 = vector.load %arg6[%c0_10, %c0_11, %c0_12] : memref<1x16x16xi8, #tpu.memory_space<vmem>>, vector<1x16x16xi8>
    %c0_i8 = arith.constant 0 : i8
    %15 = vector.broadcast %c0_i8 : i8 to vector<1x16x16xi8>
    %16 = arith.cmpi ne, %14, %15 : vector<1x16x16xi8>
    %17 = arith.subf %12, %13 : vector<1x16x16xf32>
    %18 = math.absf %17 : vector<1x16x16xf32>
    %cst = arith.constant 0.000000e+00 : f32
    %19 = vector.broadcast %cst : f32 to vector<1x16x16xf32>
    %20 = arith.select %16, %18, %19 : vector<1x16x16xi1>, vector<1x16x16xf32>
    %c0_13 = arith.constant 0 : index
    %c0_14 = arith.constant 0 : index
    %c0_15 = arith.constant 0 : index
    %21 = vector.load %arg9[%c0_13, %c0_14, %c0_15] : memref<1x1x16xf32, #tpu.memory_space<vmem>>, vector<1x1x16xf32>
    %cst_16 = arith.constant dense<0.000000e+00> : vector<1x16xf32>
    %22 = vector.multi_reduction <add>, %20, %cst_16 [1] : vector<1x16x16xf32> to vector<1x16xf32>
    %23 = vector.shape_cast %22 : vector<1x16xf32> to vector<1x1x16xf32>
    %24 = arith.addf %21, %23 : vector<1x1x16xf32>
    %c0_17 = arith.constant 0 : index
    %c0_18 = arith.constant 0 : index
    %c0_19 = arith.constant 0 : index
    %25 = vector.load %arg9[%c0_17, %c0_18, %c0_19] : memref<1x1x16xf32, #tpu.memory_space<vmem>>, vector<1x1x16xf32>
    tpu.vector_store %arg9[%c0_17, %c0_18, %c0_19], %24 {strides = array<i32>} : memref<1x1x16xf32, #tpu.memory_space<vmem>>, vector<1x1x16xf32>,
    %c0_20 = arith.constant 0 : index
    %c0_21 = arith.constant 0 : index
    %c0_22 = arith.constant 0 : index
    %26 = vector.load %arg10[%c0_20, %c0_21, %c0_22] : memref<1x1x16xi32, #tpu.memory_space<vmem>>, vector<1x1x16xi32>
    %27 = arith.extui %16 : vector<1x16x16xi1> to vector<1x16x16xi32>
    %cst_23 = arith.constant dense<0> : vector<1x16xi32>
    %28 = vector.multi_reduction <add>, %27, %cst_23 [1] : vector<1x16x16xi32> to vector<1x16xi32>
    %29 = vector.shape_cast %28 : vector<1x16xi32> to vector<1x1x16xi32>
    %30 = arith.addi %26, %29 : vector<1x1x16xi32>
    %c0_24 = arith.constant 0 : index
    %c0_25 = arith.constant 0 : index
    %c0_26 = arith.constant 0 : index
    %31 = vector.load %arg10[%c0_24, %c0_25, %c0_26] : memref<1x1x16xi32, #tpu.memory_space<vmem>>, vector<1x1x16xi32>
    tpu.vector_store %arg10[%c0_24, %c0_25, %c0_26], %30 {strides = array<i32>} : memref<1x1x16xi32, #tpu.memory_space<vmem>>, vector<1x1x16xi32>,
    %32 = arith.extui %9 : i1 to i32
    %c0_i32_27 = arith.constant 0 : i32
    %33 = arith.cmpi ne, %32, %c0_i32_27 : i32
    scf.if %33 {
      %c0_28 = arith.constant 0 : index
      %c0_29 = arith.constant 0 : index
      %c0_30 = arith.constant 0 : index
      %34 = vector.load %arg9[%c0_28, %c0_29, %c0_30] : memref<1x1x16xf32, #tpu.memory_space<vmem>>, vector<1x1x16xf32>
      %cst_31 = arith.constant dense<0.000000e+00> : vector<1x1xf32>
      %35 = vector.multi_reduction <add>, %34, %cst_31 [2] : vector<1x1x16xf32> to vector<1x1xf32>
      %36 = vector.shape_cast %35 : vector<1x1xf32> to vector<1x1x1xf32>
      %c0_32 = arith.constant 0 : index
      %c0_33 = arith.constant 0 : index
      %c0_34 = arith.constant 0 : index
      %37 = vector.load %arg10[%c0_32, %c0_33, %c0_34] : memref<1x1x16xi32, #tpu.memory_space<vmem>>, vector<1x1x16xi32>
      %cst_35 = arith.constant dense<0> : vector<1x1xi32>
      %38 = vector.multi_reduction <add>, %37, %cst_35 [2] : vector<1x1x16xi32> to vector<1x1xi32>
      %39 = vector.shape_cast %38 : vector<1x1xi32> to vector<1x1x1xi32>
      %40 = vector.shape_cast %36 : vector<1x1x1xf32> to vector<1x1x1xf32>
      %41 = vector.broadcast %40 : vector<1x1x1xf32> to vector<1x1x128xf32>
      %c0_36 = arith.constant 0 : index
      %c0_37 = arith.constant 0 : index
      %c0_38 = arith.constant 0 : index
      %42 = vector.load %arg7[%c0_36, %c0_37, %c0_38] : memref<1x1x128xf32, #tpu.memory_space<vmem>>, vector<1x1x128xf32>
      tpu.vector_store %arg7[%c0_36, %c0_37, %c0_38], %41 {strides = array<i32>} : memref<1x1x128xf32, #tpu.memory_space<vmem>>, vector<1x1x128xf32>,
      %43 = vector.shape_cast %39 : vector<1x1x1xi32> to vector<1x1x1xi32>
      %44 = vector.broadcast %43 : vector<1x1x1xi32> to vector<1x1x128xi32>
      %c0_39 = arith.constant 0 : index
      %c0_40 = arith.constant 0 : index
      %c0_41 = arith.constant 0 : index
      %45 = vector.load %arg8[%c0_39, %c0_40, %c0_41] : memref<1x1x128xi32, #tpu.memory_space<vmem>>, vector<1x1x128xi32>
      tpu.vector_store %arg8[%c0_39, %c0_40, %c0_41], %44 {strides = array<i32>} : memref<1x1x128xi32, #tpu.memory_space<vmem>>, vector<1x1x128xi32>,
    } else {
    }
    return
  }
  func.func @transform_0(%arg0: i32, %arg1: i32, %arg2: i32, %arg3: i32) -> (i32, i32, i32) {
    %c1_i32 = arith.constant 1 : i32
    %0 = arith.muli %arg3, %c1_i32 : i32
    %1 = arith.addi %0, %arg2 : i32
    %c0_i32 = arith.constant 0 : i32
    return %arg0, %1, %arg1 : i32, i32, i32
  }
  func.func @transform_1(%arg0: i32, %arg1: i32, %arg2: i32, %arg3: i32) -> (i32, i32, i32) {
    %c1_i32 = arith.constant 1 : i32
    %0 = arith.muli %arg3, %c1_i32 : i32
    %1 = arith.addi %0, %arg2 : i32
    %c0_i32 = arith.constant 0 : i32
    return %arg0, %1, %arg1 : i32, i32, i32
  }
  func.func @transform_2(%arg0: i32, %arg1: i32, %arg2: i32, %arg3: i32) -> (i32, i32, i32) {
    %c0_i32 = arith.constant 0 : i32
    return %arg0, %arg2, %arg1 : i32, i32, i32
  }
  func.func @transform_3(%arg0: i32, %arg1: i32, %arg2: i32, %arg3: i32) -> (i32, i32, i32) {
    %c0_i32 = arith.constant 0 : i32
    %c0_i32_0 = arith.constant 0 : i32
    %c0_i32_1 = arith.constant 0 : i32
    return %arg0, %c0_i32, %c0_i32_0 : i32, i32, i32
  }
  func.func @transform_4(%arg0: i32, %arg1: i32, %arg2: i32, %arg3: i32) -> (i32, i32, i32) {
    %c0_i32 = arith.constant 0 : i32
    %c0_i32_0 = arith.constant 0 : i32
    %c0_i32_1 = arith.constant 0 : i32
    return %arg0, %c0_i32, %c0_i32_0 : i32, i32, i32
  }
}

</mosaic_0001>

<llo_original>
// kernel: _masked_l1_jit.1
$region0: #{_masked_l1_jit.1}
  #allocation0 [shape = 'u32[]', space=smem, size = 0x4, offset = 0x4, fixed_abs, tag = 'smem constant byte address 0x4 - core index']
  #allocation1 [shape = 'u32[144,128]{1,0:T(1,128)}', space=vmem, size = 0x12000, scoped, tag = 'internal scratch']
  #allocation2 [shape = 'f32[1,1,16]{2,1,0:T(1,128)}', space=vmem, size = 0x200, scoped, tag = 'scratch operand']
  #allocation3 [shape = 's32[1,1,16]{2,1,0:T(1,128)}', space=vmem, size = 0x200, scoped, tag = 'scratch operand']
  %s0 = inlined_call_operand.hbm [shape: f32[2,64,16], index: 0, kind: input, shape index: {}]
  %s1 = inlined_call_operand.hbm [shape: f32[2,64,16], index: 1, kind: input, shape index: {}]
  %s2 = inlined_call_operand.vmem [shape: s8[2,16,16], index: 2, kind: input, shape index: {}]
  %s3 = inlined_call_operand.vmem [shape: f32[2,1,128], index: 3, kind: output, shape index: {0}]
  %s4 = inlined_call_operand.vmem [shape: s32[2,1,128], index: 4, kind: output, shape index: {1}]
  %5 = xla_tuple %s3, %s4
  %s6 = sld [smem:[#allocation0]]
  $region69: #{_masked_l1_jit.1} parent=0
    _
  %s8 = ssub.s32 1, %s6
  %s9 = scalar_select 0, %s8, %s6
  $region1: #{_masked_l1_jit.1} parent=0
    #allocation4 [shape = 'u8[16384]{0}', space=vmem, size = 0x4000, scoped, tag = 'input window, operand 0']
    #allocation5 [shape = 's32[2]{0}', space=sflag, size = 0x8, scoped, tag = 'scoped memory for _masked_l1_jit.1']
    #allocation6 [shape = 'u8[16384]{0}', space=vmem, size = 0x4000, scoped, tag = 'input window, operand 1']
    #allocation7 [shape = 's32[2]{0}', space=sflag, size = 0x8, scoped, tag = 'scoped memory for _masked_l1_jit.1']
    %10 = vsyncpa [#allocation5], 0
    %s11 = scalar_lea.sflag [#allocation5], 1
    %12 = vsyncpa %s11, 0
    %13 = vsyncpa [#allocation7], 0
    %s14 = scalar_lea.sflag [#allocation7], 1
    %15 = vsyncpa %s14, 0
    loop: start=0, step=1, limit=10
    $region2: #{_masked_l1_jit.1} parent=1 // loop_pre_header
      _
    $region3: #{_masked_l1_jit.1} parent=1 // loop_header
      %s17 = sphi 0, %s21
      %p18 = scmp.ge.s32.totalorder %s17, 10
      %s24 = sphi 0, %s50
      %s25 = sphi 0, %s46
      %s26 = sphi 0, %s42
      %s27 = sphi 0, %s38
      %s28 = sphi 0, %s24
      %s29 = sphi 0, %s25
      %s30 = sphi 0, %s26
      %s31 = sphi 0, %s27
      %s32 = sphi 0, %s28
      %s33 = sphi 0, %s29
      %s34 = sphi 0, %s30
      %s35 = sphi 0, %s31
      %s59 = sphi 0, %s61
      %s62 = sphi 0, %s59
      %s63 = sphi 0, %s62
      %s79 = sphi 0, %s63
      %s91 = sphi 0, %s93
      %s94 = sphi 0, %s91
      %s95 = sphi 0, %s94
      %s111 = sphi 0, %s95
      %s121 = sphi 0, %s123
      %s124 = sphi 0, %s121
      %s125 = sphi 0, %s124
      %s141 = sphi 0, %s125
      %s147 = sphi 0, %s149
      %s150 = sphi 0, %s147
      %s151 = sphi 0, %s150
      %s167 = sphi 0, %s151
      %s173 = sphi 0, %s175
      %s176 = sphi 0, %s173
      %s177 = sphi 0, %s176
      %s193 = sphi 0, %s177
    $region4: #{_masked_l1_jit.1} parent=1 // loop_header_branch
      %20 = sbr.rel (%p18) target = $region8
    $region5: #{_masked_l1_jit.1} parent=1 // loop_body
      %s22 = ssub.s32 %s17, 1
      %s23 = ssub.s32 %s17, 2
      %s36 = sadd.s32 1, %s27
      %p37 = scmp.ge.s32.totalorder %s36, 4
      %s38 = scalar_select %p37, 0, %s36
      %s39 = sadd.s32 1, %s26
      %s40 = scalar_select %p37, %s39, %s26
      %p41 = scmp.ge.s32.totalorder %s40, 1
      %s42 = scalar_select %p41, 0, %s40
      %s43 = sadd.s32 1, %s25
      %s44 = scalar_select %p41, %s43, %s25
      %p45 = scmp.ge.s32.totalorder %s44, 1
      %s46 = scalar_select %p45, 0, %s44
      %s47 = sadd.s32 1, %s24
      %s48 = scalar_select %p45, %s47, %s24
      %p49 = scmp.ge.s32.totalorder %s48, 2
      %s50 = scalar_select %p49, 0, %s48
      %s51 = sadd.s32 %s27, %s26
      %s52 = sadd.s32 %s38, %s42
      %s53 = ssub.s32 %s24, %s50
      %s54 = ssub.s32 %s51, %s52
      %s55 = sor.u32 %s53, %s54
      %s56 = ssub.s32 %s25, %s46
      %s57 = sor.u32 %s55, %s56
      %p58 = scmp.eq.s32.totalorder %s57, 0
      %s60 = sadd.s32 %s59, 1
      %s61 = scalar_select %p58, %s59, %s60
      %p64 = pneg %p58
      %p65 = scmp.eq.s32.totalorder %s17, 7
      %p66 = por %p64, %p65
      %p67 = scmp.ne.s32.totalorder %s59, %s62
      %p68 = scmp.eq.s32.totalorder %s17, 0
      %p69 = por %p67, %p68
      %p70 = scmp.ne.s32.totalorder %s59, %s62
      %p71 = scmp.eq.s32.totalorder %s22, 7
      %p72 = por %p70, %p71
      %p73 = scmp.ne.s32.totalorder %s62, %s63
      %p74 = scmp.eq.s32.totalorder %s22, 0
      %p75 = por %p73, %p74
      %p76 = scmp.ne.s32.totalorder %s62, %s63
      %p77 = scmp.eq.s32.totalorder %s23, 7
      %p78 = por %p76, %p77
      %p80 = scmp.ne.s32.totalorder %s63, %s79
      %p81 = scmp.eq.s32.totalorder %s23, 0
      %p82 = por %p80, %p81
      %s83 = sadd.s32 %s27, %s26
      %s84 = sadd.s32 %s38, %s42
      %s85 = ssub.s32 %s24, %s50
      %s86 = ssub.s32 %s83, %s84
      %s87 = sor.u32 %s85, %s86
      %s88 = ssub.s32 %s25, %s46
      %s89 = sor.u32 %s87, %s88
      %p90 = scmp.eq.s32.totalorder %s89, 0
      %s92 = sadd.s32 %s91, 1
      %s93 = scalar_select %p90, %s91, %s92
      %p96 = pneg %p90
      %p97 = scmp.eq.s32.totalorder %s17, 7
      %p98 = por %p96, %p97
      %p99 = scmp.ne.s32.totalorder %s91, %s94
      %p100 = scmp.eq.s32.totalorder %s17, 0
      %p101 = por %p99, %p100
      %p102 = scmp.ne.s32.totalorder %s91, %s94
      %p103 = scmp.eq.s32.totalorder %s22, 7
      %p104 = por %p102, %p103
      %p105 = scmp.ne.s32.totalorder %s94, %s95
      %p106 = scmp.eq.s32.totalorder %s22, 0
      %p107 = por %p105, %p106
      %p108 = scmp.ne.s32.totalorder %s94, %s95
      %p109 = scmp.eq.s32.totalorder %s23, 7
      %p110 = por %p108, %p109
      %p112 = scmp.ne.s32.totalorder %s95, %s111
      %p113 = scmp.eq.s32.totalorder %s23, 0
      %p114 = por %p112, %p113
      %s115 = ssub.s32 %s24, %s50
      %s116 = ssub.s32 %s26, %s42
      %s117 = sor.u32 %s115, %s116
      %s118 = ssub.s32 %s25, %s46
      %s119 = sor.u32 %s117, %s118
      %p120 = scmp.eq.s32.totalorder %s119, 0
      %s122 = sadd.s32 %s121, 1
      %s123 = scalar_select %p120, %s121, %s122
      %p126 = pneg %p120
      %p127 = scmp.eq.s32.totalorder %s17, 7
      %p128 = por %p126, %p127
      %p129 = scmp.ne.s32.totalorder %s121, %s124
      %p130 = scmp.eq.s32.totalorder %s17, 0
      %p131 = por %p129, %p130
      %p132 = scmp.ne.s32.totalorder %s121, %s124
      %p133 = scmp.eq.s32.totalorder %s22, 7
      %p134 = por %p132, %p133
      %p135 = scmp.ne.s32.totalorder %s124, %s125
      %p136 = scmp.eq.s32.totalorder %s22, 0
      %p137 = por %p135, %p136
      %p138 = scmp.ne.s32.totalorder %s124, %s125
      %p139 = scmp.eq.s32.totalorder %s23, 7
      %p140 = por %p138, %p139
      %p142 = scmp.ne.s32.totalorder %s125, %s141
      %p143 = scmp.eq.s32.totalorder %s23, 0
      %p144 = por %p142, %p143
      %s145 = ssub.s32 %s24, %s50
      %p146 = scmp.eq.s32.totalorder %s145, 0
      %s148 = sadd.s32 %s147, 1
      %s149 = scalar_select %p146, %s147, %s148
      %p152 = pneg %p146
      %p153 = scmp.eq.s32.totalorder %s17, 7
      %p154 = por %p152, %p153
      %p155 = scmp.ne.s32.totalorder %s147, %s150
      %p156 = scmp.eq.s32.totalorder %s17, 0
      %p157 = por %p155, %p156
      %p158 = scmp.ne.s32.totalorder %s147, %s150
      %p159 = scmp.eq.s32.totalorder %s22, 7
      %p160 = por %p158, %p159
      %p161 = scmp.ne.s32.totalorder %s150, %s151
      %p162 = scmp.eq.s32.totalorder %s22, 0
      %p163 = por %p161, %p162
      %p164 = scmp.ne.s32.totalorder %s150, %s151
      %p165 = scmp.eq.s32.totalorder %s23, 7
      %p166 = por %p164, %p165
      %p168 = scmp.ne.s32.totalorder %s151, %s167
      %p169 = scmp.eq.s32.totalorder %s23, 0
      %p170 = por %p168, %p169
      %s171 = ssub.s32 %s24, %s50
      %p172 = scmp.eq.s32.totalorder %s171, 0
      %s174 = sadd.s32 %s173, 1
      %s175 = scalar_select %p172, %s173, %s174
      %p178 = pneg %p172
      %p179 = scmp.eq.s32.totalorder %s17, 7
      %p180 = por %p178, %p179
      %p181 = scmp.ne.s32.totalorder %s173, %s176
      %p182 = scmp.eq.s32.totalorder %s17, 0
      %p183 = por %p181, %p182
      %p184 = scmp.ne.s32.totalorder %s173, %s176
      %p185 = scmp.eq.s32.totalorder %s22, 7
      %p186 = por %p184, %p185
      %p187 = scmp.ne.s32.totalorder %s176, %s177
      %p188 = scmp.eq.s32.totalorder %s22, 0
      %p189 = por %p187, %p188
      %p190 = scmp.ne.s32.totalorder %s176, %s177
      %p191 = scmp.eq.s32.totalorder %s23, 7
      %p192 = por %p190, %p191
      %p194 = scmp.ne.s32.totalorder %s177, %s193
      %p195 = scmp.eq.s32.totalorder %s23, 0
      %p196 = por %p194, %p195
      %p197 = scmp.le.s32.totalorder 1, %s17
      %p198 = scmp.lt.s32.totalorder %s17, 9
      %p199 = pnand %p197, %p198
      %p200 = pneg %p199
      // Predicated region
      $region9: #{_masked_l1_jit.1} parent=5 // pred_check
        _
      $region10: #{_masked_l1_jit.1} parent=5 // pred_check_branch
        %202 = sbr.rel (%p199) target = $region12
      $region11: #{_masked_l1_jit.1} parent=5 // pred_region
        %s203 = ssub.s32 %s17, 1
      $region12: #{_masked_l1_jit.1} parent=5 // pred_fallthru
        _
      %p204 = scmp.lt.s32.totalorder %s17, 8
      // Predicated region
      $region13: #{_masked_l1_jit.1} parent=5 // pred_check
        %p205 = pneg %p204
      $region14: #{_masked_l1_jit.1} parent=5 // pred_check_branch
        %207 = sbr.rel (%p205) target = $region16
      $region15: #{_masked_l1_jit.1} parent=5 // pred_region
        // Predicated region
        $region17: #{_masked_l1_jit.1} parent=15 // pred_check
          %p208 = pneg %p69
        $region18: #{_masked_l1_jit.1} parent=15 // pred_check_branch
          %210 = sbr.rel (%p208) target = $region20
        $region19: #{_masked_l1_jit.1} parent=15 // pred_region
          %s211 = sand.u32 %s59, 1
          %s212 = scalar_lea.sflag [#allocation5], %s211
          %s213 = sand.u32 %s59, 1
          %s214 = smul.addr %s213, 16
          %s215 = scalar_lea.vmem [#allocation4], %s214
          %s216 = sadd.s32 %s27, %s26
          %s217 = smul.u32 2, %s216
          %s219 = ssub.s32 256, 256
          %220 = vsyncadd %s212, %s219
          %s221 = sadd.s32 %s25, %s217
          %s222 = smul.addr %s24, 8
          %s223 = sadd.s32 %s221, %s222
          %s224 = smul.addr %s223, 128
          %s225 = scalar_lea.hbm %s0, %s224
          %s226 = sshll.u32 %s215, 4
          %s227 = int_to_ptr.vmem [resolvable:$true] %s226
          %232 = dma.hbm_to_vmem [thread:$0]  %s225, 256, %s227, %s212, 128, 128, 8
        $region20: #{_masked_l1_jit.1} parent=15 // pred_fallthru
          _
        // Predicated region
        $region21: #{_masked_l1_jit.1} parent=15 // pred_check
          %p233 = pneg %p101
        $region22: #{_masked_l1_jit.1} parent=15 // pred_check_branch
          %235 = sbr.rel (%p233) target = $region24
        $region23: #{_masked_l1_jit.1} parent=15 // pred_region
          %s236 = sand.u32 %s91, 1
          %s237 = scalar_lea.sflag [#allocation7], %s236
          %s238 = sand.u32 %s91, 1
          %s239 = smul.addr %s238, 16
          %s240 = scalar_lea.vmem [#allocation6], %s239
          %s241 = sadd.s32 %s27, %s26
          %s242 = smul.u32 2, %s241
          %s244 = ssub.s32 256, 256
          %245 = vsyncadd %s237, %s244
          %s246 = sadd.s32 %s25, %s242
          %s247 = smul.addr %s24, 8
          %s248 = sadd.s32 %s246, %s247
          %s249 = smul.addr %s248, 128
          %s250 = scalar_lea.hbm %s1, %s249
          %s251 = sshll.u32 %s240, 4
          %s252 = int_to_ptr.vmem [resolvable:$true] %s251
          %257 = dma.hbm_to_vmem [thread:$0]  %s250, 256, %s252, %s237, 128, 128, 8
        $region24: #{_masked_l1_jit.1} parent=15 // pred_fallthru
          _
        // Predicated region
        $region25: #{_masked_l1_jit.1} parent=15 // pred_check
          %p258 = pneg %p131
        $region26: #{_masked_l1_jit.1} parent=15 // pred_check_branch
          %260 = sbr.rel (%p258) target = $region28
        $region27: #{_masked_l1_jit.1} parent=15 // pred_region
          %s261 = smul.u32 2, %s26
          %p262 = scmp.lt.s32.totalorder %s24, 1
          %s263 = scalar_select %p262, %s24, 1
          %p264 = scmp.lt.s32.totalorder %s261, 1
          %s265 = scalar_select %p264, %s261, 1
          %p266 = scmp.lt.s32.totalorder %s25, 0
          %s267 = scalar_select %p266, %s25, 0
          %s268 = sadd.s32 %s267, %s265
          %s269 = smul.addr %s263, 2
          %s270 = sadd.s32 %s268, %s269
          %s271 = smul.addr %s270, 2
          %s272 = scalar_lea.vmem %s2, %s271
          %s273 = smul.u32 2, %s26
        $region28: #{_masked_l1_jit.1} parent=15 // pred_fallthru
          _
      $region16: #{_masked_l1_jit.1} parent=5 // pred_fallthru
        _
      %p274 = scmp.le.s32.totalorder 1, %s17
      %p275 = scmp.lt.s32.totalorder %s17, 9
      %p276 = pnand %p274, %p275
      %p277 = pneg %p276
      // Predicated region
      $region29: #{_masked_l1_jit.1} parent=5 // pred_check
        _
      $region30: #{_masked_l1_jit.1} parent=5 // pred_check_branch
        %279 = sbr.rel (%p276) target = $region32
      $region31: #{_masked_l1_jit.1} parent=5 // pred_region
        %s280 = ssub.s32 %s17, 1
        %s281 = sand.u32 %s62, 1
        %s282 = scalar_lea.sflag [#allocation5], %s281
        %s283 = sand.u32 %s62, 1
        %s284 = smul.addr %s283, 16
        %s285 = scalar_lea.vmem [#allocation4], %s284
        // Predicated region
        $region33: #{_masked_l1_jit.1} parent=31 // pred_check
          %p286 = pneg %p75
        $region34: #{_masked_l1_jit.1} parent=31 // pred_check_branch
          %288 = sbr.rel (%p286) target = $region36
        $region35: #{_masked_l1_jit.1} parent=31 // pred_region
          %289 = dma.done %s282, 256
        $region36: #{_masked_l1_jit.1} parent=31 // pred_fallthru
          _
        %s290 = sand.u32 %s94, 1
        %s291 = scalar_lea.sflag [#allocation7], %s290
        %s292 = sand.u32 %s94, 1
        %s293 = smul.addr %s292, 16
        %s294 = scalar_lea.vmem [#allocation6], %s293
        // Predicated region
        $region37: #{_masked_l1_jit.1} parent=31 // pred_check
          %p295 = pneg %p107
        $region38: #{_masked_l1_jit.1} parent=31 // pred_check_branch
          %297 = sbr.rel (%p295) target = $region40
        $region39: #{_masked_l1_jit.1} parent=31 // pred_region
          %298 = dma.done %s291, 256
        $region40: #{_masked_l1_jit.1} parent=31 // pred_fallthru
          _
        %s299 = sand.u32 %s62, 1
        %s300 = scalar_lea.sflag [#allocation5], %s299
        %s301 = sand.u32 %s62, 1
        %s302 = smul.addr %s301, 16
        %s303 = scalar_lea.vmem [#allocation4], %s302
        %p304 = pneg %p75
        %p305 = pneg %p72
        %s306 = sand.u32 %s94, 1
        %s307 = scalar_lea.sflag [#allocation7], %s306
        %s308 = sand.u32 %s94, 1
        %s309 = smul.addr %s308, 16
        %s310 = scalar_lea.vmem [#allocation6], %s309
        %p311 = pneg %p107
        %p312 = pneg %p104
        %s313 = smul.u32 2, %s30
        %p314 = scmp.lt.s32.totalorder %s28, 1
        %s315 = scalar_select %p314, %s28, 1
        %p316 = scmp.lt.s32.totalorder %s313, 1
        %s317 = scalar_select %p316, %s313, 1
        %p318 = scmp.lt.s32.totalorder %s29, 0
        %s319 = scalar_select %p318, %s29, 0
        %s320 = sadd.s32 %s319, %s317
        %s321 = smul.addr %s315, 2
        %s322 = sadd.s32 %s320, %s321
        %s323 = smul.addr %s322, 2
        %s324 = scalar_lea.vmem %s2, %s323
        %p325 = pneg %p137
        %p326 = pneg %p134
        %p327 = pneg %p163
        %p328 = pneg %p160
        %p329 = scmp.lt.s32.totalorder %s28, 1
        %s330 = scalar_select %p329, %s28, 1
        %s331 = scalar_lea.vmem %s3, %s330
        %p332 = pneg %p189
        %p333 = pneg %p186
        %p334 = scmp.lt.s32.totalorder %s28, 1
        %s335 = scalar_select %p334, %s28, 1
        %s336 = scalar_lea.vmem %s4, %s335
        %s337 = sadd.s32 %s31, %s30
        %s338 = smul.u32 2, %s337
        %s339 = sadd.s32 %s31, %s30
        %s340 = smul.u32 2, %s339
        %s341 = smul.u32 2, %s30
        %p342 = scmp.lt.s32.totalorder %s28, 1
        %s343 = scalar_select %p342, %s28, 1
        %p344 = scmp.lt.s32.totalorder %s341, 1
        %s345 = scalar_select %p344, %s341, 1
        %p346 = scmp.lt.s32.totalorder %s29, 0
        %s347 = scalar_select %p346, %s29, 0
        %s348 = sadd.s32 %s347, %s345
        %s349 = smul.addr %s343, 2
        %s350 = sadd.s32 %s348, %s349
        %s351 = smul.addr %s350, 2
        %s352 = scalar_lea.vmem %s2, %s351
        %s353 = smul.u32 2, %s30
        %p354 = scmp.lt.s32.totalorder %s28, 1
        %s355 = scalar_select %p354, %s28, 1
        %s356 = scalar_lea.vmem %s3, %s355
        %p357 = scmp.lt.s32.totalorder %s28, 1
        %s358 = scalar_select %p357, %s28, 1
        %s359 = scalar_lea.vmem %s4, %s358
        %p362 = scmp.eq.s32.totalorder %s29, 0
        %p363 = scmp.eq.s32.totalorder %s30, 0
        %p364 = pnand %p362, %p363
        %p365 = pneg %p364
        %p366 = scmp.eq.s32.totalorder %s31, 0
        %p367 = pnand %p365, %p366
        %p368 = pneg %p367
        %p369 = scmp.eq.s32.totalorder %s31, 3
        %p370 = pnand %p365, %p369
        %p371 = pneg %p370
        // Predicated region
        $region41: #{_masked_l1_jit.1} parent=31 // pred_check
          _
        $region42: #{_masked_l1_jit.1} parent=31 // pred_check_branch
          %373 = sbr.rel (%p367) target = $region44
        $region43: #{_masked_l1_jit.1} parent=31 // pred_region
          %vm374 = vcmask 122880
          %375 = vst.msk [vmem:[#allocation2] sm:$0x1] %vm374, 0.0
          %376 = vst.msk [vmem:[#allocation3] sm:$0x1] %vm374, 0
        $region44: #{_masked_l1_jit.1} parent=31 // pred_fallthru
          _
        %v377 = vld [vmem:[%s285] sm:$0xff]
        %v378 = vld [vmem:[%s285 + $0x8] sm:$0xff]
        %v379 = vld [vmem:[%s294] sm:$0xff]
        %v380 = vld [vmem:[%s294 + $0x8] sm:$0xff]
        %v381 = vld [vmem:[%s352] sm:$0x3]
        %v382 = vld [vmem:[%s352 + $0x2] sm:$0x3]
        %vm383 = vnez %v381
        %vm384 = vnez %v382
        %v385 = vsub.f32 %v377, %v379
        %v386 = vsub.f32 %v378, %v380
        %v387 = vand.u32 2147483647, %v385
        %v388 = vand.u32 2147483647, %v386
        %v389 = vsel %vm383, 16843009, 0
        %v390 = vsel %vm384, 16843009, 0
        %v391 = vunpack.c.0.s8 %v389
        %v392 = vunpack.c.0.s8 %v390
        %vm393 = vcmp.ne.s32.totalorder %v391, 0
        %vm394 = vcmp.ne.s32.totalorder %v392, 0
        %v395 = vsel %vm393, %v387, 0.0
        %v396 = vsel %vm394, %v388, 0.0
        %v397 = vld [vmem:[#allocation2] sm:$0x1]
        %vm398 = vcmask 130048
        %v399 = vsel %vm398, %v395, 0.0
        %v400 = vsel %vm398, %v396, 0.0
        %v401 = vadd.f32 %v399, %v400
        %v402 = vrot.slane %v401, 4
        %v403 = vadd.f32 %v401, %v402
        %v404 = vrot.slane %v403, 2
        %v405 = vadd.f32 %v403, %v404
        %v406 = vrot.slane %v405, 1
        %v407 = vadd.f32 %v405, %v406
        %v408 = vadd.f32 %v397, %v407
        %vm409 = vcmask 122880
        %410 = vst.msk [vmem:[#allocation2] sm:$0x1] %vm409, %v408
        %v411 = vld [vmem:[#allocation3] sm:$0x1]
        %v412 = vsel %vm393, 1, 0
        %v413 = vsel %vm394, 1, 0
        %v414 = vsel %vm398, %v412, 0
        %v415 = vsel %vm398, %v413, 0
        %v416 = vadd.s32 %v414, %v415
        %v417 = vrot.slane %v416, 4
        %v418 = vadd.s32 %v416, %v417
        %v419 = vrot.slane %v418, 2
        %v420 = vadd.s32 %v418, %v419
        %v421 = vrot.slane %v420, 1
        %v422 = vadd.s32 %v420, %v421
        %v423 = vadd.s32 %v411, %v422
        %424 = vst.msk [vmem:[#allocation3] sm:$0x1] %vm409, %v423
        // Predicated region
        $region45: #{_masked_l1_jit.1} parent=31 // pred_check
          _
        $region46: #{_masked_l1_jit.1} parent=31 // pred_check_branch
          %426 = sbr.rel (%p370) target = $region48
        $region47: #{_masked_l1_jit.1} parent=31 // pred_region
          %v427 = vld [vmem:[#allocation2] sm:$0x1]
          %v428 = vsel %vm409, %v427, 0.0
          %429 = vadd.xlane.f32.xlu0 %v428
          %v430 = vpop.xlane.xlu0 %429
          %v431 = vld [vmem:[#allocation3] sm:$0x1]
          %v432 = vsel %vm409, %v431, 0
          %v433 = vand.u32 %v432, 65535
          %v434 = vshrl.u32 %v432, 16
          %v435 = vcvt.s32.f32 %v433
          %v436 = vcvt.s32.f32 %v434
          %437 = vadd.xlane.f32.xlu0 %v435
          %v438 = vpop.xlane.xlu0 %437
          %439 = vadd.xlane.f32.xlu0 %v436
          %v440 = vpop.xlane.xlu0 %439
          %v441 = vcvt.f32.s32 %v438
          %v442 = vcvt.f32.s32 %v440
          %v443 = vshll.u32 %v442, 16
          %v444 = vadd.s32 %v443, %v441
          %445 = vst [vmem:[%s356] sm:$0x1] %v430
          %446 = vst [vmem:[%s359] sm:$0x1] %v444
        $region48: #{_masked_l1_jit.1} parent=31 // pred_fallthru
          _
        %p447 = scmp.lt.s32.totalorder %s28, 1
        %s448 = scalar_select %p447, %s28, 1
        %s449 = scalar_lea.vmem %s3, %s448
        %p450 = scmp.lt.s32.totalorder %s28, 1
        %s451 = scalar_select %p450, %s28, 1
        %s452 = scalar_lea.vmem %s4, %s451
        // Predicated region
        $region49: #{_masked_l1_jit.1} parent=31 // pred_check
          %p453 = pneg %p160
        $region50: #{_masked_l1_jit.1} parent=31 // pred_check_branch
          %455 = sbr.rel (%p453) target = $region52
        $region51: #{_masked_l1_jit.1} parent=31 // pred_region
          _
        $region52: #{_masked_l1_jit.1} parent=31 // pred_fallthru
          _
        // Predicated region
        $region53: #{_masked_l1_jit.1} parent=31 // pred_check
          %p456 = pneg %p186
        $region54: #{_masked_l1_jit.1} parent=31 // pred_check_branch
          %458 = sbr.rel (%p456) target = $region56
        $region55: #{_masked_l1_jit.1} parent=31 // pred_region
          _
        $region56: #{_masked_l1_jit.1} parent=31 // pred_fallthru
          _
      $region32: #{_masked_l1_jit.1} parent=5 // pred_fallthru
        _
      %p459 = scmp.le.s32.totalorder 2, %s17
      // Predicated region
      $region57: #{_masked_l1_jit.1} parent=5 // pred_check
        %p460 = pneg %p459
      $region58: #{_masked_l1_jit.1} parent=5 // pred_check_branch
        %462 = sbr.rel (%p460) target = $region60
      $region59: #{_masked_l1_jit.1} parent=5 // pred_region
        %s463 = ssub.s32 %s17, 2
        // Predicated region
        $region61: #{_masked_l1_jit.1} parent=59 // pred_check
          %p464 = pneg %p166
        $region62: #{_masked_l1_jit.1} parent=59 // pred_check_branch
          %466 = sbr.rel (%p464) target = $region64
        $region63: #{_masked_l1_jit.1} parent=59 // pred_region
          %p467 = scmp.lt.s32.totalorder %s32, 1
          %s468 = scalar_select %p467, %s32, 1
          %s469 = scalar_lea.vmem %s3, %s468
        $region64: #{_masked_l1_jit.1} parent=59 // pred_fallthru
          _
        // Predicated region
        $region65: #{_masked_l1_jit.1} parent=59 // pred_check
          %p470 = pneg %p192
        $region66: #{_masked_l1_jit.1} parent=59 // pred_check_branch
          %472 = sbr.rel (%p470) target = $region68
        $region67: #{_masked_l1_jit.1} parent=59 // pred_region
          %p473 = scmp.lt.s32.totalorder %s32, 1
          %s474 = scalar_select %p473, %s32, 1
          %s475 = scalar_lea.vmem %s4, %s474
        $region68: #{_masked_l1_jit.1} parent=59 // pred_fallthru
          _
      $region60: #{_masked_l1_jit.1} parent=5 // pred_fallthru
        _
    $region6: #{_masked_l1_jit.1} parent=1 // loop_footer
      %s21 = sadd.s32 1, %s17
    $region7: #{_masked_l1_jit.1} parent=1 // loop_footer_branch
      %16 = sbr.rel target = $region3
    $region8: #{_masked_l1_jit.1} parent=1 // loop_exit
      _
    %476 = vsyncpa [#allocation5], 1
    %s477 = scalar_lea.sflag [#allocation5], 1
    %478 = vsyncpa %s477, 1
    %479 = vsyncpa [#allocation7], 1
    %s480 = scalar_lea.sflag [#allocation7], 1
    %481 = vsyncpa %s480, 1

</llo_original>
